<compile_context>
chip_gen: v7x
topology: tpu7x:2x2x1
jax: 0.10.0
libtpu: 0.0.40
codegen_flags: <defaults>
</compile_context>

<pallas_src>
import jax
import jax.numpy as jnp
from jax.experimental import pallas as pl
from jax.experimental.pallas import tpu as pltpu


def _gelu_tanh(x):
    # PyTorch F.gelu(..., approximate='tanh'); kept in f32 (EUP tanh path).
    c = jnp.sqrt(2.0 / jnp.pi).astype(x.dtype)
    return 0.5 * x * (1.0 + jnp.tanh(c * (x + 0.044715 * x * x * x)))


def _mlp_kernel(x_ref, w1_ref, b1_ref, w2_ref, b2_ref, o_ref):
    # fc1: MXU matmul (inputs may be f32 or bf16), f32 accumulation.
    h = jnp.dot(x_ref[...], w1_ref[...], preferred_element_type=jnp.float32)
    h = h + b1_ref[...]                      # (1, I) bias, f32, broadcasts
    h = _gelu_tanh(h)                        # f32 elementwise
    # fc2: cast activations to the weight dtype for the MXU, accumulate in f32.
    y = jnp.dot(h.astype(w2_ref.dtype), w2_ref[...],
                preferred_element_type=jnp.float32)
    y = y + b2_ref[...]                      # (1, H) bias, f32
    o_ref[...] = y.astype(o_ref.dtype)


def _round_up(a, b):
    return (a + b - 1) // b * b


def encoder_mlp(x, w1, b1, w2, b2, *, tm=None, mxu_dtype=None):
    """Fused EncoderMLP forward.

    x:  [..., H] ; w1: [H, I] ; b1: [I] ; w2: [I, H] ; b2: [H]  ->  [..., H]
    mxu_dtype: optional (e.g. jnp.bfloat16) dtype for MXU inputs (x, w1, w2);
      bias add, GELU and accumulation stay in float32.
    """
    orig_shape = x.shape
    H, I = w1.shape
    assert orig_shape[-1] == H and w2.shape == (I, H)
    out_dtype = x.dtype

    x2 = x.reshape(-1, H)
    T = x2.shape[0]

    # ---- row-tile selection -------------------------------------------------
    # Large tiles amortize the ~0.35us per-grid-step overhead and fill the MXU
    # M dimension.  Cap at 256 rows and at the (8-aligned) token count; the
    # second-to-last block dim must be a multiple of 8.
    T8 = max(8, _round_up(T, 8))
    if tm is None:
        tm = min(256, T8)
    tm = _round_up(min(tm, T8), 8)
    T_pad = _round_up(T8, tm)
    grid = (T_pad // tm,)
    # NOTE: on v7x prefer configs where grid[0] >= 2 so the "parallel" axis can
    # shard across both TensorCores; at toy sizes a single block is better.

    if T_pad != T:
        x2 = jnp.pad(x2, ((0, T_pad - T), (0, 0)))

    # Optional low-precision MXU inputs (halves weight VMEM / HBM traffic).
    if mxu_dtype is not None:
        x2 = x2.astype(mxu_dtype)
        w1 = w1.astype(mxu_dtype)
        w2 = w2.astype(mxu_dtype)

    b1_2d = b1.reshape(1, I).astype(jnp.float32)
    b2_2d = b2.reshape(1, H).astype(jnp.float32)

    # Weights/biases have constant block indices: keep them VMEM-resident with
    # a single buffer (double-buffering them is pure VMEM waste).
    resident = dict(pipeline_mode=pl.Buffered(1))

    bytes_accessed = int(
        x2.size * x2.dtype.itemsize
        + w1.size * w1.dtype.itemsize
        + w2.size * w2.dtype.itemsize
        + (b1_2d.size + b2_2d.size) * 4
        + T_pad * H * jnp.dtype(out_dtype).itemsize)
    cost = pl.CostEstimate(
        flops=int(4 * T_pad * H * I + 8 * T_pad * I),   # 2 matmuls + GELU misc
        transcendentals=int(T_pad * I),                 # tanh
        bytes_accessed=bytes_accessed)

    out = pl.pallas_call(
        _mlp_kernel,
        out_shape=jax.ShapeDtypeStruct((T_pad, H), out_dtype),
        grid_spec=pltpu.PrefetchScalarGridSpec(
            num_scalar_prefetch=0,
            grid=grid,
            in_specs=[
                pl.BlockSpec((tm, H), lambda i: (i, 0)),             # x tile
                pl.BlockSpec((H, I), lambda i: (0, 0), **resident),  # w1
                pl.BlockSpec((1, I), lambda i: (0, 0), **resident),  # b1
                pl.BlockSpec((I, H), lambda i: (0, 0), **resident),  # w2
                pl.BlockSpec((1, H), lambda i: (0, 0), **resident),  # b2
            ],
            out_specs=pl.BlockSpec((tm, H), lambda i: (i, 0)),
        ),
        compiler_params=pltpu.CompilerParams(
            dimension_semantics=("parallel",),
            vmem_limit_bytes=64 * 1024 * 1024,
        ),
        cost_estimate=cost,
    )(x2, w1, b1_2d, w2, b2_2d)

    if T_pad != T:
        out = out[:T]
    return out.reshape(orig_shape)


if __name__ == "__main__":
    # Config: hidden_size=32, intermediate_size=64; batch=2, seq=8.
    batch, seq, hidden, inter = 2, 8, 32, 64

    key = jax.random.PRNGKey(0)
    k_x, k_w1, k_b1, k_w2, k_b2 = jax.random.split(key, 5)

    x = jax.random.normal(k_x, (batch, seq, hidden), dtype=jnp.float32)
    # Deterministic synthetic parameters (not a checkpoint).
    w1 = jax.random.normal(k_w1, (hidden, inter), dtype=jnp.float32) * 0.02
    b1 = jax.random.normal(k_b1, (inter,), dtype=jnp.float32) * 0.02
    w2 = jax.random.normal(k_w2, (inter, hidden), dtype=jnp.float32) * 0.02
    b2 = jax.random.normal(k_b2, (hidden,), dtype=jnp.float32) * 0.02

    # Pure-JAX reference of the same math (tanh-approx GELU, like PyTorch).
    def ref_mlp(xx):
        xf = xx.reshape(-1, hidden)
        h = xf @ w1 + b1
        h = 0.5 * h * (1.0 + jnp.tanh(
            jnp.sqrt(2.0 / jnp.pi) * (h + 0.044715 * h ** 3)))
        return (h @ w2 + b2).reshape(xx.shape)

    ref = ref_mlp(x)

    # f32 path (strict check).
    out = encoder_mlp(x, w1, b1, w2, b2)
    jax.block_until_ready(out)
    assert out.shape == (batch, seq, hidden)
    assert jnp.allclose(out, ref, atol=1e-5, rtol=1e-5)

    # bf16 MXU-input path (v6e/v7x perf config); looser tolerance expected.
    out_bf16 = encoder_mlp(x, w1, b1, w2, b2, mxu_dtype=jnp.bfloat16)
    jax.block_until_ready(out_bf16)
    assert jnp.allclose(out_bf16, ref, atol=3e-2, rtol=3e-2)

    # Ragged token count (T=15 not a multiple of 8) exercises pad + slice path.
    x_ragged = jax.random.normal(key, (3, 5, hidden), dtype=jnp.float32)
    out_ragged = encoder_mlp(x_ragged, w1, b1, w2, b2)
    jax.block_until_ready(out_ragged)
    assert jnp.allclose(out_ragged, ref_mlp(x_ragged), atol=1e-5, rtol=1e-5)

    print("KERNEL_OK")
</pallas_src>

<mosaic_0001>
module attributes {stable_mosaic.version = 11 : i64} {
  func.func @_mlp_kernel(%arg0: i32, %arg1: memref<16x32xf32, #tpu.memory_space<vmem>>, %arg2: memref<32x64xf32, #tpu.memory_space<vmem>>, %arg3: memref<1x64xf32, #tpu.memory_space<vmem>>, %arg4: memref<64x32xf32, #tpu.memory_space<vmem>>, %arg5: memref<1x32xf32, #tpu.memory_space<vmem>>, %arg6: memref<16x32xf32, #tpu.memory_space<vmem>>) attributes {dimension_semantics = [#tpu.dimension_semantics<parallel>], iteration_bounds = array<i64: 1>, scalar_prefetch = 0 : i64, scratch_operands = 0 : i64, tpu.core_type = #tpu.core_type<tc>, window_params = [{transform_indices = @transform_0, window_bounds = array<i64: 16, 32>}, {pipeline_mode = #tpu.pipeline_mode<synchronous>, transform_indices = @transform_1, window_bounds = array<i64: 32, 64>}, {pipeline_mode = #tpu.pipeline_mode<synchronous>, transform_indices = @transform_2, window_bounds = array<i64: 1, 64>}, {pipeline_mode = #tpu.pipeline_mode<synchronous>, transform_indices = @transform_3, window_bounds = array<i64: 64, 32>}, {pipeline_mode = #tpu.pipeline_mode<synchronous>, transform_indices = @transform_4, window_bounds = array<i64: 1, 32>}, {transform_indices = @transform_5, window_bounds = array<i64: 16, 32>}]} {
    %c0 = arith.constant 0 : index
    %c0_0 = arith.constant 0 : index
    %0 = vector.load %arg1[%c0, %c0_0] : memref<16x32xf32, #tpu.memory_space<vmem>>, vector<16x32xf32>
    %c0_1 = arith.constant 0 : index
    %c0_2 = arith.constant 0 : index
    %1 = vector.load %arg2[%c0_1, %c0_2] : memref<32x64xf32, #tpu.memory_space<vmem>>, vector<32x64xf32>
    %cst = arith.constant dense<0.000000e+00> : vector<16x64xf32>
    %2 = tpu.matmul %0, %1, %cst {dimension_numbers = #tpu.dot_dimension_numbers<[1], [0], [0], [1], [0, 0, 1, 1], [], []>} : vector<16x32xf32>, vector<32x64xf32>, vector<16x64xf32> -> vector<16x64xf32>
    %c0_3 = arith.constant 0 : index
    %c0_4 = arith.constant 0 : index
    %3 = vector.load %arg3[%c0_3, %c0_4] : memref<1x64xf32, #tpu.memory_space<vmem>>, vector<1x64xf32>
    %4 = vector.broadcast %3 : vector<1x64xf32> to vector<16x64xf32>
    %5 = arith.addf %2, %4 : vector<16x64xf32>
    %cst_5 = arith.constant 0.636619746 : f32
    %6 = math.sqrt %cst_5 : f32
    %cst_6 = arith.constant 5.000000e-01 : f32
    %7 = vector.broadcast %cst_6 : f32 to vector<16x64xf32>
    %8 = arith.mulf %7, %5 : vector<16x64xf32>
    %cst_7 = arith.constant 4.471500e-02 : f32
    %9 = vector.broadcast %cst_7 : f32 to vector<16x64xf32>
    %10 = arith.mulf %9, %5 : vector<16x64xf32>
    %11 = arith.mulf %10, %5 : vector<16x64xf32>
    %12 = arith.mulf %11, %5 : vector<16x64xf32>
    %13 = arith.addf %5, %12 : vector<16x64xf32>
    %14 = vector.broadcast %6 : f32 to vector<16x64xf32>
    %15 = arith.mulf %14, %13 : vector<16x64xf32>
    %16 = math.tanh %15 : vector<16x64xf32>
    %cst_8 = arith.constant 1.000000e+00 : f32
    %17 = vector.broadcast %cst_8 : f32 to vector<16x64xf32>
    %18 = arith.addf %17, %16 : vector<16x64xf32>
    %19 = arith.mulf %8, %18 : vector<16x64xf32>
    %c0_9 = arith.constant 0 : index
    %c0_10 = arith.constant 0 : index
    %20 = vector.load %arg4[%c0_9, %c0_10] : memref<64x32xf32, #tpu.memory_space<vmem>>, vector<64x32xf32>
    %cst_11 = arith.constant dense<0.000000e+00> : vector<16x32xf32>
    %21 = tpu.matmul %19, %20, %cst_11 {dimension_numbers = #tpu.dot_dimension_numbers<[1], [0], [0], [1], [0, 0, 1, 1], [], []>} : vector<16x64xf32>, vector<64x32xf32>, vector<16x32xf32> -> vector<16x32xf32>
    %c0_12 = arith.constant 0 : index
    %c0_13 = arith.constant 0 : index
    %22 = vector.load %arg5[%c0_12, %c0_13] : memref<1x32xf32, #tpu.memory_space<vmem>>, vector<1x32xf32>
    %23 = vector.broadcast %22 : vector<1x32xf32> to vector<16x32xf32>
    %24 = arith.addf %21, %23 : vector<16x32xf32>
    %c0_14 = arith.constant 0 : index
    %c0_15 = arith.constant 0 : index
    %25 = vector.load %arg6[%c0_14, %c0_15] : memref<16x32xf32, #tpu.memory_space<vmem>>, vector<16x32xf32>
    tpu.vector_store %arg6[%c0_14, %c0_15], %24 {strides = array<i32>} : memref<16x32xf32, #tpu.memory_space<vmem>>, vector<16x32xf32>,
    return
  }
  func.func @transform_0(%arg0: i32) -> (i32, i32) {
    %c0_i32 = arith.constant 0 : i32
    %c0_i32_0 = arith.constant 0 : i32
    return %arg0, %c0_i32 : i32, i32
  }
  func.func @transform_1(%arg0: i32) -> (i32, i32) {
    %c0_i32 = arith.constant 0 : i32
    %c0_i32_0 = arith.constant 0 : i32
    %c0_i32_1 = arith.constant 0 : i32
    return %c0_i32, %c0_i32_0 : i32, i32
  }
  func.func @transform_2(%arg0: i32) -> (i32, i32) {
    %c0_i32 = arith.constant 0 : i32
    %c0_i32_0 = arith.constant 0 : i32
    %c0_i32_1 = arith.constant 0 : i32
    return %c0_i32, %c0_i32_0 : i32, i32
  }
  func.func @transform_3(%arg0: i32) -> (i32, i32) {
    %c0_i32 = arith.constant 0 : i32
    %c0_i32_0 = arith.constant 0 : i32
    %c0_i32_1 = arith.constant 0 : i32
    return %c0_i32, %c0_i32_0 : i32, i32
  }
  func.func @transform_4(%arg0: i32) -> (i32, i32) {
    %c0_i32 = arith.constant 0 : i32
    %c0_i32_0 = arith.constant 0 : i32
    %c0_i32_1 = arith.constant 0 : i32
    return %c0_i32, %c0_i32_0 : i32, i32
  }
  func.func @transform_5(%arg0: i32) -> (i32, i32) {
    %c0_i32 = arith.constant 0 : i32
    %c0_i32_0 = arith.constant 0 : i32
    return %arg0, %c0_i32 : i32, i32
  }
}

</mosaic_0001>

<llo_original>
// kernel: tpu_custom_call.1
$region0: #{tpu_custom_call.1}
  #allocation0 [shape = 'u32[]', space=smem, size = 0x4, offset = 0x4, fixed_abs, tag = 'smem constant byte address 0x4 - core index']
  #allocation1 [shape = 'u32[144,128]{1,0:T(1,128)}', space=vmem, size = 0x12000, scoped, tag = 'internal scratch']
  %s0 = inlined_call_operand.hbm [shape: f32[16,32], index: 0, kind: input, shape index: {}]
  %s1 = inlined_call_operand.hbm [shape: f32[32,64], index: 1, kind: input, shape index: {}]
  %s2 = inlined_call_operand.hbm [shape: f32[1,64], index: 2, kind: input, shape index: {}]
  %s3 = inlined_call_operand.hbm [shape: f32[64,32], index: 3, kind: input, shape index: {}]
  %s4 = inlined_call_operand.hbm [shape: f32[1,32], index: 4, kind: input, shape index: {}]
  %s5 = inlined_call_operand.hbm [shape: f32[16,32], index: 5, kind: output, shape index: {}]
  %s6 = sld [smem:[#allocation0]]
  $region50: #{tpu_custom_call.1} parent=0
    _
  %s8 = ssub.s32 1, %s6
  %s9 = scalar_select 0, %s8, %s6
  $region1: #{tpu_custom_call.1} parent=0
    #allocation2 [shape = 'u8[8192]{0}', space=vmem, size = 0x2000, scoped, tag = 'input window, operand 0, single buffered']
    #allocation3 [shape = 's32[1]{0}', space=sflag, size = 0x4, scoped, tag = 'scoped memory for tpu_custom_call.1']
    #allocation4 [shape = 's32[1]{0}', space=sflag, size = 0x4, scoped, tag = 'scoped memory for tpu_custom_call.1']
    #allocation5 [shape = 'u8[16384]{0}', space=vmem, size = 0x4000, scoped, tag = 'input window, operand 1, single buffered']
    #allocation6 [shape = 's32[1]{0}', space=sflag, size = 0x4, scoped, tag = 'scoped memory for tpu_custom_call.1']
    #allocation7 [shape = 'u8[512]{0}', space=vmem, size = 0x400, scoped, tag = 'input window, operand 2, single buffered']
    #allocation8 [shape = 'u8[32768]{0}', space=vmem, size = 0x8000, scoped, tag = 'input window, operand 3, single buffered']
    #allocation9 [shape = 's32[1]{0}', space=sflag, size = 0x4, scoped, tag = 'scoped memory for tpu_custom_call.1']
    #allocation10 [shape = 'u8[512]{0}', space=vmem, size = 0x400, scoped, tag = 'input window, operand 4, single buffered']
    #allocation11 [shape = 'u8[8192]{0}', space=vmem, size = 0x2000, scoped, tag = 'output window, operand 0, single buffered']
    %10 = vsyncpa [#allocation3], 0
    %11 = vsyncpa [#allocation6], 0
    %12 = vsyncpa [#allocation9], 0
    %13 = vsyncpa [#allocation4], 0
    // Predicated region
    $region2: #{tpu_custom_call.1} parent=1 // pred_check
      _
    $region3: #{tpu_custom_call.1} parent=1 // pred_check_branch
      %15 = sbr.rel (0) target = $region5
    $region4: #{tpu_custom_call.1} parent=1 // pred_region
      %s17 = ssub.s32 256, 256
      %18 = vsyncadd [#allocation3], %s17
      %s19 = sshll.u32 [#allocation2], 4
      %s20 = int_to_ptr.vmem [resolvable:$true] %s19
      %25 = dma.hbm_to_vmem [thread:$0]  %s0, 256, %s20, [#allocation3], 128, 128, 8
    $region5: #{tpu_custom_call.1} parent=1 // pred_fallthru
      _
    // Predicated region
    $region6: #{tpu_custom_call.1} parent=1 // pred_check
      _
    $region7: #{tpu_custom_call.1} parent=1 // pred_check_branch
      %27 = sbr.rel (0) target = $region9
    $region8: #{tpu_custom_call.1} parent=1 // pred_region
      %s29 = ssub.s32 512, 512
      %30 = vsyncadd [#allocation6], %s29
      %s31 = sshll.u32 [#allocation5], 4
      %s32 = int_to_ptr.vmem [resolvable:$true] %s31
      %37 = dma.hbm_to_vmem [thread:$0]  %s1, 512, %s32, [#allocation6], 128, 128, 8
    $region9: #{tpu_custom_call.1} parent=1 // pred_fallthru
      _
    // Predicated region
    $region10: #{tpu_custom_call.1} parent=1 // pred_check
      _
    $region11: #{tpu_custom_call.1} parent=1 // pred_check_branch
      %39 = sbr.rel (0) target = $region13
    $region12: #{tpu_custom_call.1} parent=1 // pred_region
      %s41 = ssub.s32 16, 16
      %42 = vsyncadd [#allocation6], %s41
      %s44 = sshll.u32 [#allocation7], 4
      %s45 = int_to_ptr.vmem [resolvable:$true] %s44
      %47 = dma.hbm_to_vmem [thread:$0]  %s2, 16, %s45, [#allocation6]
    $region13: #{tpu_custom_call.1} parent=1 // pred_fallthru
      _
    // Predicated region
    $region14: #{tpu_custom_call.1} parent=1 // pred_check
      _
    $region15: #{tpu_custom_call.1} parent=1 // pred_check_branch
      %49 = sbr.rel (0) target = $region17
    $region16: #{tpu_custom_call.1} parent=1 // pred_region
      %s51 = ssub.s32 1024, 1024
      %52 = vsyncadd [#allocation9], %s51
      %s53 = sshll.u32 [#allocation8], 4
      %s54 = int_to_ptr.vmem [resolvable:$true] %s53
      %59 = dma.hbm_to_vmem [thread:$0]  %s3, 1024, %s54, [#allocation9], 128, 128, 8
    $region17: #{tpu_custom_call.1} parent=1 // pred_fallthru
      _
    // Predicated region
    $region18: #{tpu_custom_call.1} parent=1 // pred_check
      _
    $region19: #{tpu_custom_call.1} parent=1 // pred_check_branch
      %61 = sbr.rel (0) target = $region21
    $region20: #{tpu_custom_call.1} parent=1 // pred_region
      %s63 = ssub.s32 16, 16
      %64 = vsyncadd [#allocation9], %s63
      %s66 = sshll.u32 [#allocation10], 4
      %s67 = int_to_ptr.vmem [resolvable:$true] %s66
      %69 = dma.hbm_to_vmem [thread:$0]  %s4, 16, %s67, [#allocation9]
    $region21: #{tpu_custom_call.1} parent=1 // pred_fallthru
      _
    // Predicated region
    $region22: #{tpu_custom_call.1} parent=1 // pred_check
      _
    $region23: #{tpu_custom_call.1} parent=1 // pred_check_branch
      %71 = sbr.rel (0) target = $region25
    $region24: #{tpu_custom_call.1} parent=1 // pred_region
      %72 = dma.done [#allocation3], 256
    $region25: #{tpu_custom_call.1} parent=1 // pred_fallthru
      _
    // Predicated region
    $region26: #{tpu_custom_call.1} parent=1 // pred_check
      _
    $region27: #{tpu_custom_call.1} parent=1 // pred_check_branch
      %74 = sbr.rel (0) target = $region29
    $region28: #{tpu_custom_call.1} parent=1 // pred_region
      %75 = dma.done [#allocation6], 512
    $region29: #{tpu_custom_call.1} parent=1 // pred_fallthru
      _
    // Predicated region
    $region30: #{tpu_custom_call.1} parent=1 // pred_check
      _
    $region31: #{tpu_custom_call.1} parent=1 // pred_check_branch
      %77 = sbr.rel (0) target = $region33
    $region32: #{tpu_custom_call.1} parent=1 // pred_region
      %78 = dma.done [#allocation6], 16
    $region33: #{tpu_custom_call.1} parent=1 // pred_fallthru
      _
    // Predicated region
    $region34: #{tpu_custom_call.1} parent=1 // pred_check
      _
    $region35: #{tpu_custom_call.1} parent=1 // pred_check_branch
      %80 = sbr.rel (0) target = $region37
    $region36: #{tpu_custom_call.1} parent=1 // pred_region
      %81 = dma.done [#allocation9], 1024
    $region37: #{tpu_custom_call.1} parent=1 // pred_fallthru
      _
    // Predicated region
    $region38: #{tpu_custom_call.1} parent=1 // pred_check
      _
    $region39: #{tpu_custom_call.1} parent=1 // pred_check_branch
      %83 = sbr.rel (0) target = $region41
    $region40: #{tpu_custom_call.1} parent=1 // pred_region
      %84 = dma.done [#allocation9], 16
    $region41: #{tpu_custom_call.1} parent=1 // pred_fallthru
      _
    %v85 = vld [vmem:[#allocation2] sm:$0xff]
    %v86 = vld [vmem:[#allocation2 + $0x8] sm:$0xff]
    %v87 = vld [vmem:[#allocation5] sm:$0xff]
    %v88 = vld [vmem:[#allocation5 + $0x8] sm:$0xff]
    %v89 = vld [vmem:[#allocation5 + $0x10] sm:$0xff]
    %v90 = vld [vmem:[#allocation5 + $0x18] sm:$0xff]
    %v91 = vld [vmem:[#allocation7] sm:$0x1]
    %v93 = vlaneseq
    %v94 = vshrl.u32 %v93, 7
    %v95 = vsub.s32 0, %v94
    %v96 = vrot.slane %v91, %v95
    %vm98 = vcmask 261120
    %v100 = vsel %vm98, %v85, 0
    %v103 = vsel %vm98, %v86, 0
    %105 = vmatprep.subr.mxu0 0.0
    %106 = vmatpush1.msra.mxu0 %v87
    %107 = vmatprep.subr.mxu0 0.0
    %108 = vmatpush1.msra.mxu0 %v88
    %109 = vmatprep.subr.mxu0 0.0
    %110 = vmatpush1.msra.mxu0 %v89
    %111 = vmatprep.subr.mxu0 0.0
    %112 = vmatpush1.msra.mxu0 %v90
    %113 = vmatprep.subr.mxu0 0.0
    %114 = vmatpush1.msra.mxu0 0.0
    %115 = vmatprep.subr.mxu0 0.0
    %116 = vmatpush1.msra.mxu0 0.0
    %117 = vmatprep.subr.mxu0 0.0
    %118 = vmatpush1.msra.mxu0 0.0
    %119 = vmatprep.subr.mxu0 0.0
    %120 = vmatpush1.msra.mxu0 0.0
    %121 = vmatprep.subr.mxu0 0.0
    %122 = vmatpush1.msra.mxu0 0.0
    %123 = vmatprep.subr.mxu0 0.0
    %124 = vmatpush1.msra.mxu0 0.0
    %125 = vmatprep.subr.mxu0 0.0
    %126 = vmatpush1.msra.mxu0 0.0
    %127 = vmatprep.subr.mxu0 0.0
    %128 = vmatpush1.msra.mxu0 0.0
    %129 = vmatprep.subr.mxu0 0.0
    %130 = vmatpush1.msra.mxu0 0.0
    %131 = vmatprep.subr.mxu0 0.0
    %132 = vmatpush1.msra.mxu0 0.0
    %133 = vmatprep.subr.mxu0 0.0
    %134 = vmatpush1.msra.mxu0 0.0
    %135 = vmatprep.subr.mxu0 0.0
    %136 = vmatpush1.msra.mxu0 0.0
    %137 = vmatprep.subr.mxu0 0.0
    %138 = vmatpush1.msra.mxu0 0.0
    %139 = vmatprep.subr.mxu0 0.0
    %140 = vmatpush1.msra.mxu0 0.0
    %141 = vmatprep.subr.mxu0 0.0
    %142 = vmatpush1.msra.mxu0 0.0
    %143 = vmatprep.subr.mxu0 0.0
    %144 = vmatpush1.msra.mxu0 0.0
    %145 = vmatprep.subr.mxu0 0.0
    %146 = vmatpush1.msra.mxu0 0.0
    %147 = vmatprep.subr.mxu0 0.0
    %148 = vmatpush1.msra.mxu0 0.0
    %149 = vmatprep.subr.mxu0 0.0
    %150 = vmatpush1.msra.mxu0 0.0
    %151 = vmatprep.subr.mxu0 0.0
    %152 = vmatpush1.msra.mxu0 0.0
    %153 = vmatprep.subr.mxu0 0.0
    %154 = vmatpush1.msra.mxu0 0.0
    %155 = vmatprep.subr.mxu0 0.0
    %156 = vmatpush1.msra.mxu0 0.0
    %157 = vmatprep.subr.mxu0 0.0
    %158 = vmatpush1.msra.mxu0 0.0
    %159 = vmatprep.subr.mxu0 0.0
    %160 = vmatpush1.msra.mxu0 0.0
    %161 = vmatprep.subr.mxu0 0.0
    %162 = vmatpush1.msra.mxu0 0.0
    %163 = vmatprep.subr.mxu0 0.0
    %164 = vmatpush1.msra.mxu0 0.0
    %165 = vmatprep.subr.mxu0 0.0
    %166 = vmatpush1.msra.mxu0 0.0
    %167 = vmatprep.subr.mxu0 0.0
    %168 = vmatpush1.msra.mxu0 0.0
    %169 = vmatprep.mubr.f32.mxu0 0.0
    %170 = vmatmul.mubr.f32.gmra.mrb[0].mxu0 %v100
    %v171 = vpop.f32.mrb[0].mxu0
    %v172 = vadd.f32 %v96, %v171
    %v173 = vpop.f32.mrb[0].mxu0
    %174 = vmatprep.mubr.f32.mxu0 0.0
    %175 = vmatmul.mubr.f32.gmra.mrb[0].mxu0 %v103
    %v176 = vpop.f32.mrb[0].mxu0
    %v177 = vadd.f32 %v96, %v176
    %v178 = vpop.f32.mrb[0].mxu0
    %179 = vdwg.mxu0
    %v180 = vmul.f32 %v172, 0.5
    %v181 = vmul.f32 %v177, 0.5
    %v182 = vmul.f32 %v172, 0.044715
    %v183 = vmul.f32 %v177, 0.044715
    %v184 = vmul.f32 %v182, %v172
    %v185 = vmul.f32 %v183, %v177
    %v186 = vmul.f32 %v184, %v172
    %v187 = vmul.f32 %v185, %v177
    %v188 = vadd.f32 %v172, %v186
    %v189 = vadd.f32 %v177, %v187
    %v190 = vmul.f32 %v188, 0.7978845
    %v191 = vmul.f32 %v189, 0.7978845
    %v192 = vtanh.pop %v190
    %v193 = vtanh.pop %v191
    %v194 = vadd.f32 %v192, 1.0
    %v195 = vadd.f32 %v193, 1.0
    %v196 = vmul.f32 %v180, %v194
    %v197 = vmul.f32 %v181, %v195
    %v198 = vld [vmem:[#allocation8] sm:$0xff]
    %v199 = vld [vmem:[#allocation8 + $0x8] sm:$0xff]
    %v200 = vld [vmem:[#allocation8 + $0x10] sm:$0xff]
    %v201 = vld [vmem:[#allocation8 + $0x18] sm:$0xff]
    %v202 = vld [vmem:[#allocation8 + $0x20] sm:$0xff]
    %v203 = vld [vmem:[#allocation8 + $0x28] sm:$0xff]
    %v204 = vld [vmem:[#allocation8 + $0x30] sm:$0xff]
    %v205 = vld [vmem:[#allocation8 + $0x38] sm:$0xff]
    %v206 = vld [vmem:[#allocation10] sm:$0x1]
    %v208 = vlaneseq
    %v209 = vshrl.u32 %v208, 7
    %v210 = vsub.s32 0, %v209
    %v211 = vrot.slane %v206, %v210
    %vm213 = vcmask 523264
    %v215 = vsel %vm213, %v196, 0
    %v218 = vsel %vm213, %v197, 0
    %220 = vmatprep.subr.mxu0 0.0
    %221 = vmatpush1.msra.mxu0 %v198
    %222 = vmatprep.subr.mxu0 0.0
    %223 = vmatpush1.msra.mxu0 %v199
    %224 = vmatprep.subr.mxu0 0.0
    %225 = vmatpush1.msra.mxu0 %v200
    %226 = vmatprep.subr.mxu0 0.0
    %227 = vmatpush1.msra.mxu0 %v201
    %228 = vmatprep.subr.mxu0 0.0
    %229 = vmatpush1.msra.mxu0 %v202
    %230 = vmatprep.subr.mxu0 0.0
    %231 = vmatpush1.msra.mxu0 %v203
    %232 = vmatprep.subr.mxu0 0.0
    %233 = vmatpush1.msra.mxu0 %v204
    %234 = vmatprep.subr.mxu0 0.0
    %235 = vmatpush1.msra.mxu0 %v205
    %236 = vmatprep.subr.mxu0 0.0
    %237 = vmatpush1.msra.mxu0 0.0
    %238 = vmatprep.subr.mxu0 0.0
    %239 = vmatpush1.msra.mxu0 0.0
    %240 = vmatprep.subr.mxu0 0.0
    %241 = vmatpush1.msra.mxu0 0.0
    %242 = vmatprep.subr.mxu0 0.0
    %243 = vmatpush1.msra.mxu0 0.0
    %244 = vmatprep.subr.mxu0 0.0
    %245 = vmatpush1.msra.mxu0 0.0
    %246 = vmatprep.subr.mxu0 0.0
    %247 = vmatpush1.msra.mxu0 0.0
    %248 = vmatprep.subr.mxu0 0.0
    %249 = vmatpush1.msra.mxu0 0.0
    %250 = vmatprep.subr.mxu0 0.0
    %251 = vmatpush1.msra.mxu0 0.0
    %252 = vmatprep.subr.mxu0 0.0
    %253 = vmatpush1.msra.mxu0 0.0
    %254 = vmatprep.subr.mxu0 0.0
    %255 = vmatpush1.msra.mxu0 0.0
    %256 = vmatprep.subr.mxu0 0.0
    %257 = vmatpush1.msra.mxu0 0.0
    %258 = vmatprep.subr.mxu0 0.0
    %259 = vmatpush1.msra.mxu0 0.0
    %260 = vmatprep.subr.mxu0 0.0
    %261 = vmatpush1.msra.mxu0 0.0
    %262 = vmatprep.subr.mxu0 0.0
    %263 = vmatpush1.msra.mxu0 0.0
    %264 = vmatprep.subr.mxu0 0.0
    %265 = vmatpush1.msra.mxu0 0.0
    %266 = vmatprep.subr.mxu0 0.0
    %267 = vmatpush1.msra.mxu0 0.0
    %268 = vmatprep.subr.mxu0 0.0
    %269 = vmatpush1.msra.mxu0 0.0
    %270 = vmatprep.subr.mxu0 0.0
    %271 = vmatpush1.msra.mxu0 0.0
    %272 = vmatprep.subr.mxu0 0.0
    %273 = vmatpush1.msra.mxu0 0.0
    %274 = vmatprep.subr.mxu0 0.0
    %275 = vmatpush1.msra.mxu0 0.0
    %276 = vmatprep.subr.mxu0 0.0
    %277 = vmatpush1.msra.mxu0 0.0
    %278 = vmatprep.subr.mxu0 0.0
    %279 = vmatpush1.msra.mxu0 0.0
    %280 = vmatprep.subr.mxu0 0.0
    %281 = vmatpush1.msra.mxu0 0.0
    %282 = vmatprep.subr.mxu0 0.0
    %283 = vmatpush1.msra.mxu0 0.0
    %284 = vmatprep.mubr.f32.mxu0 0.0
    %285 = vmatmul.mubr.f32.gmra.mrb[0].mxu0 %v215
    %v286 = vpop.f32.mrb[0].mxu0
    %v287 = vadd.f32 %v211, %v286
    %v288 = vpop.f32.mrb[0].mxu0
    %289 = vmatprep.mubr.f32.mxu0 0.0
    %290 = vmatmul.mubr.f32.gmra.mrb[0].mxu0 %v218
    %v291 = vpop.f32.mrb[0].mxu0
    %v292 = vadd.f32 %v211, %v291
    %v293 = vpop.f32.mrb[0].mxu0
    %294 = vdwg.mxu0
    %295 = vst.msk [vmem:[#allocation11] sm:$0xff] %vm98, %v287
    %296 = vst.msk [vmem:[#allocation11 + $0x8] sm:$0xff] %vm98, %v292
    // Predicated region
    $region42: #{tpu_custom_call.1} parent=1 // pred_check
      _
    $region43: #{tpu_custom_call.1} parent=1 // pred_check_branch
      %298 = sbr.rel (0) target = $region45
    $region44: #{tpu_custom_call.1} parent=1 // pred_region
      %s300 = ssub.s32 256, 256
      %301 = vsyncadd [#allocation4], %s300
      %s302 = sshll.u32 [#allocation11], 4
      %s303 = int_to_ptr.vmem [resolvable:$true] %s302
      %308 = dma.vmem_to_hbm [thread:$0]  %s303, 256, %s5, [#allocation4], 128, 128, 8
    $region45: #{tpu_custom_call.1} parent=1 // pred_fallthru
      _
    // Predicated region
    $region46: #{tpu_custom_call.1} parent=1 // pred_check
      _
    $region47: #{tpu_custom_call.1} parent=1 // pred_check_branch
      %310 = sbr.rel (0) target = $region49
    $region48: #{tpu_custom_call.1} parent=1 // pred_region
      %311 = dma.done [#allocation4], 256
    $region49: #{tpu_custom_call.1} parent=1 // pred_fallthru
      _
    %312 = vsyncpa [#allocation3], 1
    %313 = vsyncpa [#allocation6], 1
    %314 = vsyncpa [#allocation9], 1
    %315 = vsyncpa [#allocation4], 1

</llo_original>
